<compile_context>
chip_gen: v6e
topology: v6e:2x2x1
jax: 0.10.0
libtpu: 0.0.40
codegen_flags: <defaults>
</compile_context>

<pallas_src>
import jax
import jax.numpy as jnp
from jax.experimental import pallas as pl
from jax.experimental.pallas import tpu as pltpu


def highway_kernel(x_ref, w_ref, b_ref, o_ref):
    """Grid = (num_row_tiles, n_layers); layer axis innermost ('arbitrary').

    x_ref : (TN, Ep) f32        input activation tile (read only at layer 0)
    w_ref : (L, Ep, 3*Ep) bf16  fused, pre-transposed [Wg^T | Wn^T | Wl^T], VMEM-resident
    b_ref : (L, 1, 3*Ep) f32    fused bias            [bg   | bn   | bl  ], VMEM-resident
    o_ref : (TN, Ep) f32        carried activation AND output tile (resident across layers)
    """
    layer = pl.program_id(1)
    ep = o_ref.shape[1]

    @pl.when(layer == 0)
    def _():
        o_ref[...] = x_ref[...]

    h = o_ref[...]                       # f32 carry
    w = w_ref[layer]                     # (Ep, 3*Ep) bf16, dynamic index into resident block
    b = b_ref[layer]                     # (1, 3*Ep) f32

    # Single fused MXU matmul per layer, bf16 x bf16 -> f32 accumulation.
    pre = jnp.dot(h.astype(jnp.bfloat16), w, preferred_element_type=jnp.float32)
    pre = pre + b

    gate = jax.nn.sigmoid(pre[:, :ep])
    non_linear = jnp.maximum(pre[:, ep:2 * ep], 0.0)
    linear = pre[:, 2 * ep:]

    # lin + gate * (nl - lin)  ==  gate*nl + (1-gate)*lin  (one fewer VPU multiply)
    o_ref[...] = linear + gate * (non_linear - linear)


def _round_up(a, b):
    return (a + b - 1) // b * b


def prepare_highway_params(Wg, bg, Wn, bn, Wl, bl, weight_dtype=jnp.bfloat16):
    """One-time parameter prep (call at load time, NOT per forward).

    Wg/Wn/Wl: (L, E, E) in PyTorch (out, in) convention; bg/bn/bl: (L, E).
    Returns fused, pre-transposed, lane-padded weights (L, Ep, 3*Ep) in bf16
    and fused biases (L, 1, 3*Ep) in f32.  Padded lanes are zero, so padded
    features provably stay zero through every layer.
    """
    L, E, _ = Wg.shape
    Ep = _round_up(E, 128)

    def prep_w(W):
        # (L, out, in) -> (L, in, out), zero-pad to (L, Ep, Ep)
        return jnp.pad(jnp.transpose(W, (0, 2, 1)), ((0, 0), (0, Ep - E), (0, Ep - E)))

    def prep_b(b):
        return jnp.pad(b, ((0, 0), (0, Ep - E))).reshape(L, 1, Ep)

    w_all = jnp.concatenate([prep_w(Wg), prep_w(Wn), prep_w(Wl)], axis=-1)
    b_all = jnp.concatenate([prep_b(bg), prep_b(bn), prep_b(bl)], axis=-1)
    return w_all.astype(weight_dtype), b_all.astype(jnp.float32)


@jax.jit
def highway_forward(x, w_all, b_all):
    """x: (B, S, E); w_all: (L, Ep, 3*Ep); b_all: (L, 1, 3*Ep)."""
    B, S, E = x.shape
    L, Ep, Ep3 = w_all.shape
    N = B * S

    TN = min(_round_up(N, 8), 512)       # row tile; 512 keeps VMEM safe on v7x (64 MiB) with bf16 weights
    Np = _round_up(N, TN)

    # Pad activation (cast once to f32 for the carried state); padded lanes stay zero.
    x2 = jnp.pad(x.reshape(N, E).astype(jnp.float32), ((0, Np - N), (0, Ep - E)))

    grid = (Np // TN, L)

    # VMEM budget from the actual buffers (x in, resident out, resident W/b, 'pre' live range),
    # with headroom, clamped to a budget that fits v7x's 64 MiB per-core VMEM.
    need = (2 * TN * Ep * 4              # x input (double-buffered, f32)
            + 2 * TN * Ep * 4            # carried output block (f32)
            + 2 * L * Ep * Ep3 * w_all.dtype.itemsize   # resident fused weights
            + 2 * L * Ep3 * 4            # resident fused biases
            + 2 * TN * Ep3 * 4)          # 'pre' intermediate live range + slack
    vmem_limit = int(min(max(need + (4 << 20), 32 << 20), 48 << 20))
    # NOTE: for very large E (Ep >= ~1.5K) the resident weight block should be split
    # along the 3*Ep output axis with an extra grid dim; not needed at these sizes.

    out2 = pl.pallas_call(
        highway_kernel,
        out_shape=jax.ShapeDtypeStruct((Np, Ep), jnp.float32),
        grid_spec=pltpu.PrefetchScalarGridSpec(
            num_scalar_prefetch=0,
            grid=grid,
            in_specs=[
                pl.BlockSpec((TN, Ep), lambda n, l: (n, 0)),          # x tile (fetched once per row tile)
                pl.BlockSpec((L, Ep, Ep3), lambda n, l: (0, 0, 0)),   # fused W, resident across whole grid
                pl.BlockSpec((L, 1, Ep3), lambda n, l: (0, 0, 0)),    # fused b, resident across whole grid
            ],
            out_specs=pl.BlockSpec((TN, Ep), lambda n, l: (n, 0)),    # carried/resident output tile
        ),
        compiler_params=pltpu.CompilerParams(
            dimension_semantics=("parallel", "arbitrary"),  # rows parallel (megacore), layers sequential
            vmem_limit_bytes=vmem_limit,
        ),
    )(x2, w_all, b_all)

    return out2[:N, :E].astype(x.dtype).reshape(B, S, E)


def highway_reference(x, Wg, bg, Wn, bn, Wl, bl):
    """Pure-JAX f32 reference mirroring the PyTorch forward."""
    L = Wg.shape[0]
    for l in range(L):
        gate = jax.nn.sigmoid(x @ Wg[l].T + bg[l])
        non_linear = jnp.maximum(x @ Wn[l].T + bn[l], 0.0)
        linear = x @ Wl[l].T + bl[l]
        x = gate * non_linear + (1.0 - gate) * linear
    return x


def highway_reference_bf16(x, Wg, bg, Wn, bn, Wl, bl):
    """Reference that mirrors the kernel's bf16-matmul / f32-accumulate numerics."""
    L = Wg.shape[0]
    h = x.astype(jnp.float32)
    for l in range(L):
        hb = h.astype(jnp.bfloat16)

        def mm(W):
            return jnp.dot(hb, W.T.astype(jnp.bfloat16), preferred_element_type=jnp.float32)

        gate = jax.nn.sigmoid(mm(Wg[l]) + bg[l])
        non_linear = jnp.maximum(mm(Wn[l]) + bn[l], 0.0)
        linear = mm(Wl[l]) + bl[l]
        h = linear + gate * (non_linear - linear)
    return h.astype(x.dtype)


if __name__ == "__main__":
    # Small config consistent with the module: n_highway_layers=2, n_embed=32.
    batch, seq, n_embed, n_layers = 2, 8, 32, 2

    key = jax.random.PRNGKey(0)
    keys = jax.random.split(key, 7)

    # PyTorch Linear default init: U(-1/sqrt(E), 1/sqrt(E)).
    bound = 1.0 / (n_embed ** 0.5)

    def uni(k, shape):
        return jax.random.uniform(k, shape, jnp.float32, -bound, bound)

    x = jax.random.normal(keys[0], (batch, seq, n_embed), jnp.float32)
    Wg = uni(keys[1], (n_layers, n_embed, n_embed))
    bg = uni(keys[2], (n_layers, n_embed))
    Wn = uni(keys[3], (n_layers, n_embed, n_embed))
    bn = uni(keys[4], (n_layers, n_embed))
    Wl = uni(keys[5], (n_layers, n_embed, n_embed))
    bl = uni(keys[6], (n_layers, n_embed))

    # One-time parameter prep (hoisted out of the forward).
    w_all, b_all = prepare_highway_params(Wg, bg, Wn, bn, Wl, bl)
    w_all, b_all = jax.block_until_ready((w_all, b_all))

    out = highway_forward(x, w_all, b_all)
    out = jax.block_until_ready(out)

    # Tight check vs a reference that mirrors the kernel's bf16/f32 numerics.
    ref_bf16 = highway_reference_bf16(x, Wg, bg, Wn, bn, Wl, bl)
    assert out.shape == ref_bf16.shape
    assert jnp.allclose(out, ref_bf16, atol=2e-3, rtol=2e-3), (
        "mismatch vs bf16-mirrored reference, max abs err "
        f"{float(jnp.max(jnp.abs(out - ref_bf16)))}")

    # Loose sanity check vs the full-f32 PyTorch-semantics reference
    # (tolerance relaxed because weights/LHS run through the bf16 MXU path).
    ref_f32 = highway_reference(x, Wg, bg, Wn, bn, Wl, bl)
    assert jnp.allclose(out, ref_f32, atol=1e-1, rtol=1e-1), (
        "mismatch vs f32 reference, max abs err "
        f"{float(jnp.max(jnp.abs(out - ref_f32)))}")

    print("KERNEL_OK")
</pallas_src>

<mosaic_0001>
module attributes {stable_mosaic.version = 11 : i64} {
  func.func @highway_kernel(%arg0: i32, %arg1: i32, %arg2: memref<16x128xf32, #tpu.memory_space<vmem>>, %arg3: memref<2x128x384xbf16, #tpu.memory_space<vmem>>, %arg4: memref<2x1x384xf32, #tpu.memory_space<vmem>>, %arg5: memref<16x128xf32, #tpu.memory_space<vmem>>) attributes {dimension_semantics = [#tpu.dimension_semantics<parallel>, #tpu.dimension_semantics<arbitrary>], iteration_bounds = array<i64: 1, 2>, scalar_prefetch = 0 : i64, scratch_operands = 0 : i64, tpu.core_type = #tpu.core_type<tc>, window_params = [{transform_indices = @transform_0, window_bounds = array<i64: 16, 128>}, {pipeline_mode = #tpu.pipeline_mode<synchronous>, transform_indices = @transform_1, window_bounds = array<i64: 2, 128, 384>}, {pipeline_mode = #tpu.pipeline_mode<synchronous>, transform_indices = @transform_2, window_bounds = array<i64: 2, 1, 384>}, {transform_indices = @transform_3, window_bounds = array<i64: 16, 128>}]} {
    %c0_i32 = arith.constant 0 : i32
    %0 = arith.cmpi eq, %arg1, %c0_i32 : i32
    %1 = arith.extui %0 : i1 to i32
    %c0_i32_0 = arith.constant 0 : i32
    %2 = arith.cmpi ne, %1, %c0_i32_0 : i32
    scf.if %2 {
      %c0_10 = arith.constant 0 : index
      %c0_11 = arith.constant 0 : index
      %28 = vector.load %arg2[%c0_10, %c0_11] : memref<16x128xf32, #tpu.memory_space<vmem>>, vector<16x128xf32>
      %c0_12 = arith.constant 0 : index
      %c0_13 = arith.constant 0 : index
      %29 = vector.load %arg5[%c0_12, %c0_13] : memref<16x128xf32, #tpu.memory_space<vmem>>, vector<16x128xf32>
      tpu.vector_store %arg5[%c0_12, %c0_13], %28 {strides = array<i32>} : memref<16x128xf32, #tpu.memory_space<vmem>>, vector<16x128xf32>,
    } else {
    }
    %c0 = arith.constant 0 : index
    %c0_1 = arith.constant 0 : index
    %3 = vector.load %arg5[%c0, %c0_1] : memref<16x128xf32, #tpu.memory_space<vmem>>, vector<16x128xf32>
    %4 = arith.index_cast %arg1 : i32 to index
    %c0_2 = arith.constant 0 : index
    %c0_3 = arith.constant 0 : index
    %5 = vector.load %arg3[%4, %c0_2, %c0_3] : memref<2x128x384xbf16, #tpu.memory_space<vmem>>, vector<1x128x384xbf16>
    %6 = vector.shape_cast %5 : vector<1x128x384xbf16> to vector<128x384xbf16>
    %7 = arith.index_cast %arg1 : i32 to index
    %c0_4 = arith.constant 0 : index
    %c0_5 = arith.constant 0 : index
    %8 = vector.load %arg4[%7, %c0_4, %c0_5] : memref<2x1x384xf32, #tpu.memory_space<vmem>>, vector<1x1x384xf32>
    %9 = vector.shape_cast %8 : vector<1x1x384xf32> to vector<1x384xf32>
    %10 = arith.truncf %3 : vector<16x128xf32> to vector<16x128xbf16>
    %cst = arith.constant dense<0.000000e+00> : vector<16x384xf32>
    %11 = tpu.matmul %10, %6, %cst {dimension_numbers = #tpu.dot_dimension_numbers<[1], [0], [0], [1], [0, 0, 1, 1], [], []>} : vector<16x128xbf16>, vector<128x384xbf16>, vector<16x384xf32> -> vector<16x384xf32>
    %12 = vector.broadcast %9 : vector<1x384xf32> to vector<16x384xf32>
    %13 = arith.addf %11, %12 : vector<16x384xf32>
    %14 = vector.extract_strided_slice %13 {offsets = [0, 0], sizes = [16, 128], strides = [1, 1]} : vector<16x384xf32> to vector<16x128xf32>
    %15 = arith.negf %14 : vector<16x128xf32>
    %16 = math.exp %15 : vector<16x128xf32>
    %cst_6 = arith.constant 1.000000e+00 : f32
    %17 = vector.broadcast %cst_6 : f32 to vector<16x128xf32>
    %18 = arith.addf %17, %16 : vector<16x128xf32>
    %19 = arith.divf %17, %18 : vector<16x128xf32>
    %20 = vector.extract_strided_slice %13 {offsets = [0, 128], sizes = [16, 128], strides = [1, 1]} : vector<16x384xf32> to vector<16x128xf32>
    %cst_7 = arith.constant 0.000000e+00 : f32
    %21 = vector.broadcast %cst_7 : f32 to vector<16x128xf32>
    %22 = arith.maximumf %20, %21 : vector<16x128xf32>
    %23 = vector.extract_strided_slice %13 {offsets = [0, 256], sizes = [16, 128], strides = [1, 1]} : vector<16x384xf32> to vector<16x128xf32>
    %24 = arith.subf %22, %23 : vector<16x128xf32>
    %25 = arith.mulf %19, %24 : vector<16x128xf32>
    %26 = arith.addf %23, %25 : vector<16x128xf32>
    %c0_8 = arith.constant 0 : index
    %c0_9 = arith.constant 0 : index
    %27 = vector.load %arg5[%c0_8, %c0_9] : memref<16x128xf32, #tpu.memory_space<vmem>>, vector<16x128xf32>
    tpu.vector_store %arg5[%c0_8, %c0_9], %26 {strides = array<i32>} : memref<16x128xf32, #tpu.memory_space<vmem>>, vector<16x128xf32>,
    return
  }
  func.func @transform_0(%arg0: i32, %arg1: i32) -> (i32, i32) {
    %c0_i32 = arith.constant 0 : i32
    %c0_i32_0 = arith.constant 0 : i32
    return %arg0, %c0_i32 : i32, i32
  }
  func.func @transform_1(%arg0: i32, %arg1: i32) -> (i32, i32, i32) {
    %c0_i32 = arith.constant 0 : i32
    %c0_i32_0 = arith.constant 0 : i32
    %c0_i32_1 = arith.constant 0 : i32
    %c0_i32_2 = arith.constant 0 : i32
    return %c0_i32, %c0_i32_0, %c0_i32_1 : i32, i32, i32
  }
  func.func @transform_2(%arg0: i32, %arg1: i32) -> (i32, i32, i32) {
    %c0_i32 = arith.constant 0 : i32
    %c0_i32_0 = arith.constant 0 : i32
    %c0_i32_1 = arith.constant 0 : i32
    %c0_i32_2 = arith.constant 0 : i32
    return %c0_i32, %c0_i32_0, %c0_i32_1 : i32, i32, i32
  }
  func.func @transform_3(%arg0: i32, %arg1: i32) -> (i32, i32) {
    %c0_i32 = arith.constant 0 : i32
    %c0_i32_0 = arith.constant 0 : i32
    return %arg0, %c0_i32 : i32, i32
  }
}

</mosaic_0001>

<llo_original>
// kernel: highway_forward.1
$region0: #{highway_forward.1}
  #allocation0 [shape = 'u32[]', space=smem, size = 0x4, offset = 0x4, fixed_abs, tag = 'smem constant byte address 0x4 - core index']
  #allocation1 [shape = 'u32[144,128]{1,0:T(1,128)}', space=vmem, size = 0x12000, scoped, tag = 'internal scratch']
  %s0 = inlined_call_operand.vmem [shape: f32[16,128], index: 0, kind: input, shape index: {}]
  %s1 = inlined_call_operand.hbm [shape: bf16[2,128,384], index: 1, kind: input, shape index: {}]
  %s2 = inlined_call_operand.vmem [shape: f32[2,1,384], index: 2, kind: input, shape index: {}]
  %s3 = inlined_call_operand.vmem [shape: f32[16,128], index: 3, kind: output, shape index: {}]
  %s4 = sld [smem:[#allocation0]]
  $region53: #{highway_forward.1} parent=0
    _
  %s6 = ssub.s32 1, %s4
  %s7 = scalar_select 0, %s6, %s4
  $region1: #{highway_forward.1} parent=0
    #allocation2 [shape = 'u8[196608]{0}', space=vmem, size = 0x30000, scoped, tag = 'input window, operand 1, single buffered']
    #allocation3 [shape = 's32[2]{0}', space=sflag, size = 0x8, scoped, tag = 'scoped memory for highway_forward.1']
    %8 = vsyncpa [#allocation3], 0
    loop: start=0, step=1, limit=4
    $region2: #{highway_forward.1} parent=1 // loop_pre_header
      _
    $region3: #{highway_forward.1} parent=1 // loop_header
      %s10 = sphi 0, %s14
      %p11 = scmp.ge.s32.totalorder %s10, 4
      %s17 = sphi 0, %s29
      %s18 = sphi 0, %s25
      %s19 = sphi 0, %s17
      %s20 = sphi 0, %s18
      %s21 = sphi 0, %s19
      %s22 = sphi 0, %s20
      %s32 = sphi 0, %s34
      %s35 = sphi 0, %s32
      %s36 = sphi 0, %s35
      %s52 = sphi 0, %s36
      %s56 = sphi 0, %s56
      %s58 = sphi 0, %s56
      %s59 = sphi 0, %s58
      %s73 = sphi 0, %s59
      %s77 = sphi 0, %s77
      %s79 = sphi 0, %s77
      %s80 = sphi 0, %s79
      %s94 = sphi 0, %s80
      %s100 = sphi 0, %s102
      %s103 = sphi 0, %s100
      %s104 = sphi 0, %s103
      %s120 = sphi 0, %s104
    $region4: #{highway_forward.1} parent=1 // loop_header_branch
      %13 = sbr.rel (%p11) target = $region8
    $region5: #{highway_forward.1} parent=1 // loop_body
      %s15 = ssub.s32 %s10, 1
      %s16 = ssub.s32 %s10, 2
      %s23 = sadd.s32 1, %s18
      %p24 = scmp.ge.s32.totalorder %s23, 2
      %s25 = scalar_select %p24, 0, %s23
      %s26 = sadd.s32 1, %s17
      %s27 = scalar_select %p24, %s26, %s17
      %p28 = scmp.ge.s32.totalorder %s27, 1
      %s29 = scalar_select %p28, 0, %s27
      %s30 = ssub.s32 %s17, %s29
      %p31 = scmp.eq.s32.totalorder %s30, 0
      %s33 = sadd.s32 %s32, 1
      %s34 = scalar_select %p31, %s32, %s33
      %p37 = pneg %p31
      %p38 = scmp.eq.s32.totalorder %s10, 1
      %p39 = por %p37, %p38
      %p40 = scmp.ne.s32.totalorder %s32, %s35
      %p41 = scmp.eq.s32.totalorder %s10, 0
      %p42 = por %p40, %p41
      %p43 = scmp.ne.s32.totalorder %s32, %s35
      %p44 = scmp.eq.s32.totalorder %s15, 1
      %p45 = por %p43, %p44
      %p46 = scmp.ne.s32.totalorder %s35, %s36
      %p47 = scmp.eq.s32.totalorder %s15, 0
      %p48 = por %p46, %p47
      %p49 = scmp.ne.s32.totalorder %s35, %s36
      %p50 = scmp.eq.s32.totalorder %s16, 1
      %p51 = por %p49, %p50
      %p53 = scmp.ne.s32.totalorder %s36, %s52
      %p54 = scmp.eq.s32.totalorder %s16, 0
      %p55 = por %p53, %p54
      %s57 = sadd.s32 %s56, 1
      %p60 = scmp.eq.s32.totalorder %s10, 1
      %p61 = scmp.ne.s32.totalorder %s56, %s58
      %p62 = scmp.eq.s32.totalorder %s10, 0
      %p63 = por %p61, %p62
      %p64 = scmp.ne.s32.totalorder %s56, %s58
      %p65 = scmp.eq.s32.totalorder %s15, 1
      %p66 = por %p64, %p65
      %p67 = scmp.ne.s32.totalorder %s58, %s59
      %p68 = scmp.eq.s32.totalorder %s15, 0
      %p69 = por %p67, %p68
      %p70 = scmp.ne.s32.totalorder %s58, %s59
      %p71 = scmp.eq.s32.totalorder %s16, 1
      %p72 = por %p70, %p71
      %p74 = scmp.ne.s32.totalorder %s59, %s73
      %p75 = scmp.eq.s32.totalorder %s16, 0
      %p76 = por %p74, %p75
      %s78 = sadd.s32 %s77, 1
      %p81 = scmp.eq.s32.totalorder %s10, 1
      %p82 = scmp.ne.s32.totalorder %s77, %s79
      %p83 = scmp.eq.s32.totalorder %s10, 0
      %p84 = por %p82, %p83
      %p85 = scmp.ne.s32.totalorder %s77, %s79
      %p86 = scmp.eq.s32.totalorder %s15, 1
      %p87 = por %p85, %p86
      %p88 = scmp.ne.s32.totalorder %s79, %s80
      %p89 = scmp.eq.s32.totalorder %s15, 0
      %p90 = por %p88, %p89
      %p91 = scmp.ne.s32.totalorder %s79, %s80
      %p92 = scmp.eq.s32.totalorder %s16, 1
      %p93 = por %p91, %p92
      %p95 = scmp.ne.s32.totalorder %s80, %s94
      %p96 = scmp.eq.s32.totalorder %s16, 0
      %p97 = por %p95, %p96
      %s98 = ssub.s32 %s17, %s29
      %p99 = scmp.eq.s32.totalorder %s98, 0
      %s101 = sadd.s32 %s100, 1
      %s102 = scalar_select %p99, %s100, %s101
      %p105 = pneg %p99
      %p106 = scmp.eq.s32.totalorder %s10, 1
      %p107 = por %p105, %p106
      %p108 = scmp.ne.s32.totalorder %s100, %s103
      %p109 = scmp.eq.s32.totalorder %s10, 0
      %p110 = por %p108, %p109
      %p111 = scmp.ne.s32.totalorder %s100, %s103
      %p112 = scmp.eq.s32.totalorder %s15, 1
      %p113 = por %p111, %p112
      %p114 = scmp.ne.s32.totalorder %s103, %s104
      %p115 = scmp.eq.s32.totalorder %s15, 0
      %p116 = por %p114, %p115
      %p117 = scmp.ne.s32.totalorder %s103, %s104
      %p118 = scmp.eq.s32.totalorder %s16, 1
      %p119 = por %p117, %p118
      %p121 = scmp.ne.s32.totalorder %s104, %s120
      %p122 = scmp.eq.s32.totalorder %s16, 0
      %p123 = por %p121, %p122
      %p124 = scmp.le.s32.totalorder 1, %s10
      %p125 = scmp.lt.s32.totalorder %s10, 3
      %p126 = pnand %p124, %p125
      %p127 = pneg %p126
      // Predicated region
      $region9: #{highway_forward.1} parent=5 // pred_check
        _
      $region10: #{highway_forward.1} parent=5 // pred_check_branch
        %129 = sbr.rel (%p126) target = $region12
      $region11: #{highway_forward.1} parent=5 // pred_region
        %s130 = ssub.s32 %s10, 1
        // Predicated region
        $region13: #{highway_forward.1} parent=11 // pred_check
          %p131 = pneg %p48
        $region14: #{highway_forward.1} parent=11 // pred_check_branch
          %133 = sbr.rel (%p131) target = $region16
        $region15: #{highway_forward.1} parent=11 // pred_region
          %s134 = smul.u32 2, %s19
          %p135 = scmp.lt.s32.totalorder %s134, 1
          %s136 = scalar_select %p135, %s134, 1
          %s137 = smul.addr %s136, 8
          %s138 = scalar_lea.vmem %s0, %s137
          %s139 = smul.u32 2, %s19
        $region16: #{highway_forward.1} parent=11 // pred_fallthru
          _
        // Predicated region
        $region17: #{highway_forward.1} parent=11 // pred_check
          %p140 = pneg %p69
        $region18: #{highway_forward.1} parent=11 // pred_check_branch
          %142 = sbr.rel (%p140) target = $region20
        $region19: #{highway_forward.1} parent=11 // pred_region
          %s144 = ssub.s32 6144, 6144
          %145 = vsyncadd [#allocation3], %s144
          %s146 = sshll.u32 [#allocation2], 4
          %s147 = int_to_ptr.vmem [resolvable:$true] %s146
          %152 = dma.hbm_to_vmem [thread:$0]  %s1, 6144, %s147, [#allocation3], 192, 192, 12
        $region20: #{highway_forward.1} parent=11 // pred_fallthru
          _
        // Predicated region
        $region21: #{highway_forward.1} parent=11 // pred_check
          %p153 = pneg %p90
        $region22: #{highway_forward.1} parent=11 // pred_check_branch
          %155 = sbr.rel (%p153) target = $region24
        $region23: #{highway_forward.1} parent=11 // pred_region
          _
        $region24: #{highway_forward.1} parent=11 // pred_fallthru
          _
      $region12: #{highway_forward.1} parent=5 // pred_fallthru
        _
      %p156 = scmp.lt.s32.totalorder %s10, 2
      // Predicated region
      $region25: #{highway_forward.1} parent=5 // pred_check
        %p157 = pneg %p156
      $region26: #{highway_forward.1} parent=5 // pred_check_branch
        %159 = sbr.rel (%p157) target = $region28
      $region27: #{highway_forward.1} parent=5 // pred_region
        _
      $region28: #{highway_forward.1} parent=5 // pred_fallthru
        _
      %p160 = scmp.le.s32.totalorder 1, %s10
      %p161 = scmp.lt.s32.totalorder %s10, 3
      %p162 = pnand %p160, %p161
      %p163 = pneg %p162
      // Predicated region
      $region29: #{highway_forward.1} parent=5 // pred_check
        _
      $region30: #{highway_forward.1} parent=5 // pred_check_branch
        %165 = sbr.rel (%p162) target = $region32
      $region31: #{highway_forward.1} parent=5 // pred_region
        %s166 = ssub.s32 %s10, 1
        // Predicated region
        $region33: #{highway_forward.1} parent=31 // pred_check
          %p167 = pneg %p69
        $region34: #{highway_forward.1} parent=31 // pred_check_branch
          %169 = sbr.rel (%p167) target = $region36
        $region35: #{highway_forward.1} parent=31 // pred_region
          %170 = dma.done [#allocation3], 6144
        $region36: #{highway_forward.1} parent=31 // pred_fallthru
          _
        %s171 = smul.u32 2, %s19
        %p172 = scmp.lt.s32.totalorder %s171, 1
        %s173 = scalar_select %p172, %s171, 1
        %s174 = smul.addr %s173, 8
        %s175 = scalar_lea.vmem %s0, %s174
        %p176 = pneg %p48
        %p177 = pneg %p45
        %p178 = pneg %p69
        %p179 = pneg %p66
        %p180 = pneg %p90
        %p181 = pneg %p87
        %p182 = pneg %p116
        %p183 = pneg %p113
        %s184 = smul.u32 2, %s19
        %p185 = scmp.lt.s32.totalorder %s184, 1
        %s186 = scalar_select %p185, %s184, 1
        %s187 = smul.addr %s186, 8
        %s188 = scalar_lea.vmem %s3, %s187
        %s189 = smul.u32 2, %s19
        %p190 = scmp.lt.s32.totalorder %s189, 1
        %s191 = scalar_select %p190, %s189, 1
        %s192 = smul.addr %s191, 8
        %s193 = scalar_lea.vmem %s0, %s192
        %s194 = smul.u32 2, %s19
        %s195 = smul.u32 2, %s19
        %p196 = scmp.lt.s32.totalorder %s195, 1
        %s197 = scalar_select %p196, %s195, 1
        %s198 = smul.addr %s197, 8
        %s199 = scalar_lea.vmem %s3, %s198
        %s200 = smul.u32 2, %s19
        %p202 = scmp.eq.s32.totalorder %s20, 0
        // Predicated region
        $region37: #{highway_forward.1} parent=31 // pred_check
          %p203 = pneg %p202
        $region38: #{highway_forward.1} parent=31 // pred_check_branch
          %205 = sbr.rel (%p203) target = $region40
        $region39: #{highway_forward.1} parent=31 // pred_region
          %v206 = vld [vmem:[%s193] sm:$0xff]
          %v207 = vld [vmem:[%s193 + $0x8] sm:$0xff]
          %208 = vst [vmem:[%s199] sm:$0xff] %v206
          %209 = vst [vmem:[%s199 + $0x8] sm:$0xff] %v207
        $region40: #{highway_forward.1} parent=31 // pred_fallthru
          _
        %v210 = vld [vmem:[%s199] sm:$0xff]
        %v211 = vld [vmem:[%s199 + $0x8] sm:$0xff]
        %s212 = smul.u32 %s20, 48
        %s213 = smul.addr %s212, 4
        %s214 = scalar_lea.vmem [#allocation2], %s213
        %v215 = vld [vmem:[%s214] sm:$0xff]
        %v216 = vld [vmem:[%s214 + $0x8] sm:$0xf]
        %v217 = vld [vmem:[%s214 + $0xc] sm:$0xff]
        %v218 = vld [vmem:[%s214 + $0x14] sm:$0xf]
        %v219 = vld [vmem:[%s214 + $0x18] sm:$0xff]
        %v220 = vld [vmem:[%s214 + $0x20] sm:$0xf]
        %v221 = vld [vmem:[%s214 + $0x24] sm:$0xff]
        %v222 = vld [vmem:[%s214 + $0x2c] sm:$0xf]
        %v223 = vld [vmem:[%s214 + $0x30] sm:$0xff]
        %v224 = vld [vmem:[%s214 + $0x38] sm:$0xf]
        %v225 = vld [vmem:[%s214 + $0x3c] sm:$0xff]
        %v226 = vld [vmem:[%s214 + $0x44] sm:$0xf]
        %v227 = vld [vmem:[%s214 + $0x48] sm:$0xff]
        %v228 = vld [vmem:[%s214 + $0x50] sm:$0xf]
        %v229 = vld [vmem:[%s214 + $0x54] sm:$0xff]
        %v230 = vld [vmem:[%s214 + $0x5c] sm:$0xf]
        %v231 = vld [vmem:[%s214 + $0x60] sm:$0xff]
        %v232 = vld [vmem:[%s214 + $0x68] sm:$0xf]
        %v233 = vld [vmem:[%s214 + $0x6c] sm:$0xff]
        %v234 = vld [vmem:[%s214 + $0x74] sm:$0xf]
        %v235 = vld [vmem:[%s214 + $0x78] sm:$0xff]
        %v236 = vld [vmem:[%s214 + $0x80] sm:$0xf]
        %v237 = vld [vmem:[%s214 + $0x84] sm:$0xff]
        %v238 = vld [vmem:[%s214 + $0x8c] sm:$0xf]
        %v239 = vld [vmem:[%s214 + $0x90] sm:$0xff]
        %v240 = vld [vmem:[%s214 + $0x98] sm:$0xf]
        %v241 = vld [vmem:[%s214 + $0x9c] sm:$0xff]
        %v242 = vld [vmem:[%s214 + $0xa4] sm:$0xf]
        %v243 = vld [vmem:[%s214 + $0xa8] sm:$0xff]
        %v244 = vld [vmem:[%s214 + $0xb0] sm:$0xf]
        %v245 = vld [vmem:[%s214 + $0xb4] sm:$0xff]
        %v246 = vld [vmem:[%s214 + $0xbc] sm:$0xf]
        %s247 = smul.u32 %s20, 3
        %s248 = scalar_lea.vmem %s2, %s247
        %v249 = vld [vmem:[%s248] sm:$0x7]
        %v250 = vpack.c.bf16 %v211, %v210
        %v252 = vlaneseq
        %v253 = vshrl.u32 %v252, 7
        %v254 = vsub.s32 0, %v253
        %v255 = vrot.slane %v249, %v254
        %v256 = vlaneseq
        %v257 = vshrl.u32 %v256, 7
        %v258 = vsub.s32 1, %v257
        %v259 = vrot.slane %v249, %v258
        %v260 = vlaneseq
        %v261 = vshrl.u32 %v260, 7
        %v262 = vsub.s32 2, %v261
        %v263 = vrot.slane %v249, %v262
        %v299 = vunpack.c.l.b16 %v215
        %v300 = vunpack.c.h.b16 %v215
        %v301 = vunpack.c.l.b16 %v216
        %v302 = vunpack.c.l.b16 %v217
        %v303 = vunpack.c.h.b16 %v217
        %v304 = vunpack.c.l.b16 %v218
        %v305 = vunpack.c.l.b16 %v219
        %v306 = vunpack.c.h.b16 %v219
        %v307 = vunpack.c.l.b16 %v220
        %v308 = vunpack.c.l.b16 %v221
        %v309 = vunpack.c.h.b16 %v221
        %v310 = vunpack.c.l.b16 %v222
        %v311 = vunpack.c.l.b16 %v223
        %v312 = vunpack.c.h.b16 %v223
        %v313 = vunpack.c.l.b16 %v224
        %v314 = vunpack.c.l.b16 %v225
        %v315 = vunpack.c.h.b16 %v225
        %v316 = vunpack.c.l.b16 %v226
        %v317 = vunpack.c.l.b16 %v227
        %v318 = vunpack.c.h.b16 %v227
        %v319 = vunpack.c.l.b16 %v228
        %v320 = vunpack.c.l.b16 %v229
        %v321 = vunpack.c.h.b16 %v229
        %v322 = vunpack.c.l.b16 %v230
        %v323 = vunpack.c.l.b16 %v231
        %v324 = vunpack.c.h.b16 %v231
        %v325 = vunpack.c.l.b16 %v232
        %v326 = vunpack.c.l.b16 %v233
        %v327 = vunpack.c.h.b16 %v233
        %v328 = vunpack.c.l.b16 %v234
        %v329 = vunpack.c.l.b16 %v235
        %v330 = vunpack.c.h.b16 %v235
        %v331 = vunpack.c.l.b16 %v236
        %v332 = vunpack.c.l.b16 %v237
        %v333 = vunpack.c.h.b16 %v237
        %v334 = vunpack.c.l.b16 %v238
        %v335 = vunpack.c.l.b16 %v239
        %v336 = vunpack.c.h.b16 %v239
        %v337 = vunpack.c.l.b16 %v240
        %v338 = vunpack.c.l.b16 %v241
        %v339 = vunpack.c.h.b16 %v241
        %v340 = vunpack.c.l.b16 %v242
        %v341 = vunpack.c.l.b16 %v243
        %v342 = vunpack.c.h.b16 %v243
        %v343 = vunpack.c.l.b16 %v244
        %v344 = vunpack.c.l.b16 %v245
        %v345 = vunpack.c.h.b16 %v245
        %v346 = vunpack.c.l.b16 %v246
        %v347 = vpack.c.b16 %v302, %v299
        %v348 = vpack.c.b16 %v303, %v300
        %v349 = vpack.c.b16 %v304, %v301
        %v350 = vpack.c.b16 %v308, %v305
        %v351 = vpack.c.b16 %v309, %v306
        %v352 = vpack.c.b16 %v310, %v307
        %v353 = vpack.c.b16 %v314, %v311
        %v354 = vpack.c.b16 %v315, %v312
        %v355 = vpack.c.b16 %v316, %v313
        %v356 = vpack.c.b16 %v320, %v317
        %v357 = vpack.c.b16 %v321, %v318
        %v358 = vpack.c.b16 %v322, %v319
        %v359 = vpack.c.b16 %v326, %v323
        %v360 = vpack.c.b16 %v327, %v324
        %v361 = vpack.c.b16 %v328, %v325
        %v362 = vpack.c.b16 %v332, %v329
        %v363 = vpack.c.b16 %v333, %v330
        %v364 = vpack.c.b16 %v334, %v331
        %v365 = vpack.c.b16 %v338, %v335
        %v366 = vpack.c.b16 %v339, %v336
        %v367 = vpack.c.b16 %v340, %v337
        %v368 = vpack.c.b16 %v344, %v341
        %v369 = vpack.c.b16 %v345, %v342
        %v370 = vpack.c.b16 %v346, %v343
        %395 = vmatprep.subr.bf16.mxu0 %v369
        %396 = vmatpush1.bf16.msra.mxu0 %v368
        %397 = vmatprep.subr.bf16.mxu0 %v366
        %398 = vmatpush1.bf16.msra.mxu0 %v365
        %399 = vmatprep.subr.bf16.mxu0 %v363
        %400 = vmatpush1.bf16.msra.mxu0 %v362
        %401 = vmatprep.subr.bf16.mxu0 %v360
        %402 = vmatpush1.bf16.msra.mxu0 %v359
        %403 = vmatprep.subr.bf16.mxu0 %v357
        %404 = vmatpush1.bf16.msra.mxu0 %v356
        %405 = vmatprep.subr.bf16.mxu0 %v354
        %406 = vmatpush1.bf16.msra.mxu0 %v353
        %407 = vmatprep.subr.bf16.mxu0 %v351
        %408 = vmatpush1.bf16.msra.mxu0 %v350
        %409 = vmatprep.subr.bf16.mxu0 %v348
        %410 = vmatpush1.bf16.msra.mxu0 %v347
        %411 = vmatprep.subr.bf16.mxu0 0
        %412 = vmatpush2.bf16.msra.mxu0 0
        %413 = vmatprep.subr.bf16.mxu0 0
        %414 = vmatpush2.bf16.msra.mxu0 0
        %415 = vmatprep.subr.bf16.mxu0 0
        %416 = vmatpush2.bf16.msra.mxu0 0
        %417 = vmatprep.subr.bf16.mxu0 0
        %418 = vmatpush2.bf16.msra.mxu0 0
        %419 = vmatprep.subr.bf16.mxu0 0
        %420 = vmatpush2.bf16.msra.mxu0 0
        %421 = vmatprep.subr.bf16.mxu0 0
        %422 = vmatpush2.bf16.msra.mxu0 0
        %423 = vmatprep.subr.bf16.mxu0 0
        %424 = vmatpush2.bf16.msra.mxu0 0
        %425 = vmatprep.subr.bf16.mxu0 0
        %426 = vmatpush2.bf16.msra.mxu0 0
        %427 = vmatprep.mubr.bf16.mxu0 0
        %428 = vmatmul.mubr.bf16.gmra.mxu0 %v250
        %v429 = vpop.f32.mrf.mxu0
        %v430 = vadd.f32 %v255, %v429
        %v431 = vpop.f32.mrf.mxu0
        %v432 = vadd.f32 %v259, %v431
        %v433 = vpop.f32.mrf.mxu0
        %v434 = vadd.f32 %v255, %v433
        %v435 = vpop.f32.mrf.mxu0
        %v436 = vadd.f32 %v259, %v435
        %437 = vdwg.mxu0
        %438 = vmatprep.subr.bf16.mxu0 0
        %439 = vmatpush1.bf16.msra.mxu0 %v370
        %440 = vmatprep.subr.bf16.mxu0 0
        %441 = vmatpush1.bf16.msra.mxu0 %v367
        %442 = vmatprep.subr.bf16.mxu0 0
        %443 = vmatpush1.bf16.msra.mxu0 %v364
        %444 = vmatprep.subr.bf16.mxu0 0
        %445 = vmatpush1.bf16.msra.mxu0 %v361
        %446 = vmatprep.subr.bf16.mxu0 0
        %447 = vmatpush1.bf16.msra.mxu0 %v358
        %448 = vmatprep.subr.bf16.mxu0 0
        %449 = vmatpush1.bf16.msra.mxu0 %v355
        %450 = vmatprep.subr.bf16.mxu0 0
        %451 = vmatpush1.bf16.msra.mxu0 %v352
        %452 = vmatprep.subr.bf16.mxu0 0
        %453 = vmatpush1.bf16.msra.mxu0 %v349
        %454 = vmatprep.subr.bf16.mxu0 0
        %455 = vmatpush2.bf16.msra.mxu0 0
        %456 = vmatprep.subr.bf16.mxu0 0
        %457 = vmatpush2.bf16.msra.mxu0 0
        %458 = vmatprep.subr.bf16.mxu0 0
        %459 = vmatpush2.bf16.msra.mxu0 0
        %460 = vmatprep.subr.bf16.mxu0 0
        %461 = vmatpush2.bf16.msra.mxu0 0
        %462 = vmatprep.subr.bf16.mxu0 0
        %463 = vmatpush2.bf16.msra.mxu0 0
        %464 = vmatprep.subr.bf16.mxu0 0
        %465 = vmatpush2.bf16.msra.mxu0 0
        %466 = vmatprep.subr.bf16.mxu0 0
        %467 = vmatpush2.bf16.msra.mxu0 0
        %468 = vmatprep.subr.bf16.mxu0 0
        %469 = vmatpush2.bf16.msra.mxu0 0
        %470 = vmatprep.mubr.bf16.mxu0 0
        %471 = vmatmul.mubr.bf16.gmra.mxu0 %v250
        %v472 = vpop.f32.mrf.mxu0
        %v473 = vadd.f32 %v263, %v472
        %v474 = vpop.f32.mrf.mxu0
        %v475 = vpop.f32.mrf.mxu0
        %v476 = vadd.f32 %v263, %v475
        %v477 = vpop.f32.mrf.mxu0
        %478 = vdwg.mxu0
        %v479 = vxor.u32 %v430, 2147483648
        %v480 = vxor.u32 %v434, 2147483648
        %v481 = vmul.f32 %v479, 1.442695
        %v482 = vpow.pop %v481
        %v483 = vmul.f32 %v480, 1.442695
        %v484 = vpow.pop %v483
        %v485 = vadd.f32 %v482, 1.0
        %v486 = vadd.f32 %v484, 1.0
        %v487 = vrcp.pop %v485
        %v488 = vmul.f32 1.0, %v487
        %v489 = vrcp.pop %v486
        %v490 = vmul.f32 1.0, %v489
        %v491 = vmax.f32 %v432, 0.0
        %v492 = vmax.f32 %v436, 0.0
        %v493 = vsub.f32 %v491, %v473
        %v494 = vsub.f32 %v492, %v476
        %v495 = vmul.f32 %v488, %v493
        %v496 = vmul.f32 %v490, %v494
        %v497 = vadd.f32 %v473, %v495
        %v498 = vadd.f32 %v476, %v496
        %499 = vst [vmem:[%s199] sm:$0xff] %v497
        %500 = vst [vmem:[%s199 + $0x8] sm:$0xff] %v498
        %s501 = smul.u32 2, %s19
        %p502 = scmp.lt.s32.totalorder %s501, 1
        %s503 = scalar_select %p502, %s501, 1
        %s504 = smul.addr %s503, 8
        %s505 = scalar_lea.vmem %s3, %s504
        // Predicated region
        $region41: #{highway_forward.1} parent=31 // pred_check
          %p506 = pneg %p113
        $region42: #{highway_forward.1} parent=31 // pred_check_branch
          %508 = sbr.rel (%p506) target = $region44
        $region43: #{highway_forward.1} parent=31 // pred_region
          %s509 = smul.u32 2, %s19
        $region44: #{highway_forward.1} parent=31 // pred_fallthru
          _
        // Predicated region
        $region45: #{highway_forward.1} parent=31 // pred_check
          %p510 = pneg %p113
        $region46: #{highway_forward.1} parent=31 // pred_check_branch
          %512 = sbr.rel (%p510) target = $region48
        $region47: #{highway_forward.1} parent=31 // pred_region
          %s513 = smul.u32 2, %s19
          %p514 = scmp.lt.s32.totalorder %s513, 1
          %s515 = scalar_select %p514, %s513, 1
          %s516 = smul.addr %s515, 8
          %s517 = scalar_lea.vmem %s3, %s516
        $region48: #{highway_forward.1} parent=31 // pred_fallthru
          _
      $region32: #{highway_forward.1} parent=5 // pred_fallthru
        _
      %p518 = scmp.le.s32.totalorder 2, %s10
      // Predicated region
      $region49: #{highway_forward.1} parent=5 // pred_check
        %p519 = pneg %p518
      $region50: #{highway_forward.1} parent=5 // pred_check_branch
        %521 = sbr.rel (%p519) target = $region52
      $region51: #{highway_forward.1} parent=5 // pred_region
        %s522 = ssub.s32 %s10, 2
      $region52: #{highway_forward.1} parent=5 // pred_fallthru
        _
    $region6: #{highway_forward.1} parent=1 // loop_footer
      %s14 = sadd.s32 1, %s10
    $region7: #{highway_forward.1} parent=1 // loop_footer_branch
      %9 = sbr.rel target = $region3
    $region8: #{highway_forward.1} parent=1 // loop_exit
      _
    %523 = vsyncpa [#allocation3], 1
    %s524 = scalar_lea.sflag [#allocation3], 1
    %525 = vsyncpa %s524, 1

</llo_original>
